<compile_context>
chip_gen: v6e
topology: v6e:2x2x1
jax: 0.10.0
libtpu: 0.0.40
codegen_flags: <defaults>
</compile_context>

<pallas_src>
import jax
import jax.numpy as jnp
from jax.experimental import pallas as pl
from jax.experimental.pallas import tpu as pltpu


def _round_up(x, m):
    return ((x + m - 1) // m) * m


def _vmem_block_bytes(rows, cols, itemsize):
    # Lane/sublane-padded VMEM footprint of a 2-D block.
    return _round_up(max(rows, 1), 8) * _round_up(max(cols, 1), 128) * itemsize


def edge_embedding_kernel(ids_ref, dis_ref, table_ref, w_dis_ref, b_ref, out_ref):
    # ids_ref   : [tile_e, 2]            int32   (col 0 = id_u, col 1 = id_v)
    # dis_ref   : [tile_e, input_dim]    bf16
    # table_ref : [2*num_atoms, out_f_p] bf16    (rows [0,N) = h@W_u, [N,2N) = h@W_v)
    # w_dis_ref : [input_dim, out_f_p]   bf16    (= W_dis @ W_m, folded)
    # b_ref     : [1, out_f_p]           f32     (= b_dis @ W_m, folded)
    tile_e = ids_ref.shape[0]
    two_n = table_ref.shape[0]
    num_atoms = two_n // 2
    cdt = table_ref.dtype

    # One combined one-hot over the stacked [u ; v] table: the two comparisons
    # hit disjoint column ranges, so OR == sum of the two one-hots.
    iota = jax.lax.broadcasted_iota(jnp.int32, (tile_e, two_n), 1)
    id_u = ids_ref[:, 0:1]                       # [tile_e, 1]
    id_v = ids_ref[:, 1:2]
    onehot = ((iota == id_u) | (iota == (id_v + num_atoms))).astype(cdt)

    # Single gather+project matmul, plus the folded dis linear, one f32 acc stream.
    acc = jnp.dot(onehot, table_ref[...], preferred_element_type=jnp.float32)
    acc = acc + jnp.dot(dis_ref[...], w_dis_ref[...],
                        preferred_element_type=jnp.float32)
    acc = acc + b_ref[...]
    out_ref[...] = acc.astype(out_ref.dtype)


def edge_embedding(h, id_u, id_v, dis, params, *, tile_e=512,
                   compute_dtype=jnp.bfloat16, out_dtype=None):
    """params (pre-transposed, [in, out]):
       w_dis [input_dim, edge_feat], b_dis [1, edge_feat],
       w_u [atom_feat, out_feat], w_v [atom_feat, out_feat], w_m [edge_feat, out_feat].

    out_dtype=None keeps the module's dtype (h.dtype); pass jnp.bfloat16 to halve
    output HBM traffic when downstream tolerates it."""
    E, input_dim = dis.shape
    num_atoms, atom_feat = h.shape
    out_feat = params["w_u"].shape[1]
    out_dtype = h.dtype if out_dtype is None else out_dtype
    f32 = jnp.float32

    # ---- Fold all edge-independent math in f32, cast to compute dtype once. ----
    #   out = h[id_u]@W_u + h[id_v]@W_v + dis@(W_dis@W_m) + b_dis@W_m
    h_f = h.astype(f32)
    table = jnp.concatenate(
        [h_f @ params["w_u"].astype(f32), h_f @ params["w_v"].astype(f32)],
        axis=0)                                                  # [2N, out_feat]
    w_dis_f = params["w_dis"].astype(f32) @ params["w_m"].astype(f32)  # [in, out_feat]
    b_f = params["b_dis"].astype(f32) @ params["w_m"].astype(f32)      # [1, out_feat]

    # ---- Lane-dense output columns (pad the tiny folded weights, not the data). ----
    out_feat_p = _round_up(out_feat, 128)
    pad_o = out_feat_p - out_feat
    if pad_o:
        table = jnp.pad(table, ((0, 0), (0, pad_o)))
        w_dis_f = jnp.pad(w_dis_f, ((0, 0), (0, pad_o)))
        b_f = jnp.pad(b_f, ((0, 0), (0, pad_o)))
    table_c = table.astype(compute_dtype)
    w_dis_c = w_dis_f.astype(compute_dtype)

    dis_c = dis.astype(compute_dtype)
    ids = jnp.stack([id_u.astype(jnp.int32), id_v.astype(jnp.int32)], axis=1)  # [E, 2]

    # ---- Edge tiling: no padding of E; at least 2 grid steps so both v7x TCs work. ----
    tile = max(8, _round_up(min(tile_e, _round_up(pl.cdiv(E, 2), 8)), 8))
    grid = (pl.cdiv(E, tile),)

    # ---- VMEM budget (v7x: 64 MiB / TC; resident operands may be double-buffered). ----
    itemsize_c = jnp.dtype(compute_dtype).itemsize
    itemsize_o = jnp.dtype(out_dtype).itemsize
    resident = (_vmem_block_bytes(2 * num_atoms, out_feat_p, itemsize_c)
                + _vmem_block_bytes(input_dim, out_feat_p, itemsize_c)
                + _vmem_block_bytes(1, out_feat_p, 4))
    per_step = 2 * (_vmem_block_bytes(tile, 2, 4)
                    + _vmem_block_bytes(tile, input_dim, itemsize_c)
                    + _vmem_block_bytes(tile, out_feat_p, itemsize_o))
    if resident > 24 * 1024 * 1024:
        # TODO(synk): manual DMA row-gather path for huge atom/feature counts.
        raise ValueError(
            f"folded gather table ({resident} B) exceeds the VMEM residency budget")
    vmem_limit = int(min(100 * 1024 * 1024,
                         max(32 * 1024 * 1024, 2 * resident + per_step)))

    edge_block = lambda c: pl.BlockSpec((tile, c), lambda i: (i, 0))
    const_block = lambda r, c: pl.BlockSpec((r, c), lambda i: (0, 0))

    out = pl.pallas_call(
        edge_embedding_kernel,
        out_shape=jax.ShapeDtypeStruct((E, out_feat_p), out_dtype),
        grid_spec=pltpu.PrefetchScalarGridSpec(
            num_scalar_prefetch=0,
            grid=grid,
            in_specs=[
                edge_block(2),                          # ids    [E, 2] i32
                edge_block(input_dim),                  # dis    [E, input_dim]
                const_block(2 * num_atoms, out_feat_p), # folded gather table
                const_block(input_dim, out_feat_p),     # W_dis @ W_m
                const_block(1, out_feat_p),             # b_dis @ W_m (f32)
            ],
            out_specs=edge_block(out_feat_p),
        ),
        compiler_params=pltpu.CompilerParams(
            dimension_semantics=("parallel",),
            vmem_limit_bytes=vmem_limit),
    )(ids, dis_c, table_c, w_dis_c, b_f)

    # Only slice when out_features is not already lane-dense (avoids an extra HBM
    # copy pass in the common aligned case).
    return out if pad_o == 0 else out[:, :out_feat]


def edge_embedding_ref(h, id_u, id_v, dis, params):
    h_u = h[id_u]
    h_v = h[id_v]
    m = dis @ params["w_dis"] + params["b_dis"]
    m = jnp.concatenate([h_u, h_v, m], axis=-1)
    w_full = jnp.concatenate([params["w_u"], params["w_v"], params["w_m"]], axis=0)
    return m @ w_full


if __name__ == "__main__":
    # Small, deterministic setup consistent with the module's shapes.
    atom_features = 32
    edge_features = 32
    out_features = 128        # multiple of 128 -> zero wrapper-side post-processing
    input_dim = 8
    num_atoms = 16
    num_edges = 200           # deliberately not a multiple of the tile size

    key = jax.random.PRNGKey(0)
    k_h, k_dis, k_u, k_v, k_wd, k_bd, k_w = jax.random.split(key, 7)

    h = jax.random.normal(k_h, (num_atoms, atom_features), dtype=jnp.float32)
    dis = jax.random.normal(k_dis, (num_edges, input_dim), dtype=jnp.float32)
    id_u = jax.random.randint(k_u, (num_edges,), 0, num_atoms)
    id_v = jax.random.randint(k_v, (num_edges,), 0, num_atoms)

    # Deterministic parameter init (stored pre-transposed: [in, out]).
    w_dis = 0.1 * jax.random.normal(k_wd, (input_dim, edge_features), dtype=jnp.float32)
    b_dis = 0.1 * jax.random.normal(k_bd, (1, edge_features), dtype=jnp.float32)
    w_full = 0.1 * jax.random.normal(
        k_w, (2 * atom_features + edge_features, out_features), dtype=jnp.float32)
    params = {
        "w_dis": w_dis,
        "b_dis": b_dis,
        "w_u": w_full[:atom_features],
        "w_v": w_full[atom_features:2 * atom_features],
        "w_m": w_full[2 * atom_features:],
    }

    # tile_e=128 at E=200 -> tile=104, grid=2 (exercises tiling + masked tail block).
    out = edge_embedding(h, id_u, id_v, dis, params, tile_e=128)
    out = jax.block_until_ready(out)

    ref = edge_embedding_ref(h, id_u, id_v, dis, params)
    assert out.shape == (num_edges, out_features)
    # bf16 folded tables/operands -> slightly different rounding than the f32 ref.
    assert jnp.allclose(out, ref, atol=5e-2, rtol=5e-2)

    print("KERNEL_OK")
</pallas_src>

<mosaic_0001>
module attributes {stable_mosaic.version = 11 : i64} {
  func.func @edge_embedding_kernel(%arg0: i32, %arg1: memref<104x2xi32, #tpu.memory_space<vmem>>, %arg2: memref<104x8xbf16, #tpu.memory_space<vmem>>, %arg3: memref<32x128xbf16, #tpu.memory_space<vmem>>, %arg4: memref<8x128xbf16, #tpu.memory_space<vmem>>, %arg5: memref<1x128xf32, #tpu.memory_space<vmem>>, %arg6: memref<104x128xf32, #tpu.memory_space<vmem>>) attributes {dimension_semantics = [#tpu.dimension_semantics<parallel>], iteration_bounds = array<i64: 2>, scalar_prefetch = 0 : i64, scratch_operands = 0 : i64, tpu.core_type = #tpu.core_type<tc>, window_params = [{transform_indices = @transform_0, window_bounds = array<i64: 104, 2>}, {transform_indices = @transform_1, window_bounds = array<i64: 104, 8>}, {pipeline_mode = #tpu.pipeline_mode<synchronous>, transform_indices = @transform_2, window_bounds = array<i64: 32, 128>}, {pipeline_mode = #tpu.pipeline_mode<synchronous>, transform_indices = @transform_3, window_bounds = array<i64: 8, 128>}, {pipeline_mode = #tpu.pipeline_mode<synchronous>, transform_indices = @transform_4, window_bounds = array<i64: 1, 128>}, {transform_indices = @transform_5, window_bounds = array<i64: 104, 128>}]} {
    %0 = tpu.iota {dimensions = array<i32: 1>} : vector<104x32xi32>
    %c0 = arith.constant 0 : index
    %c0_0 = arith.constant 0 : index
    %1 = vector.load %arg1[%c0, %c0_0] : memref<104x2xi32, #tpu.memory_space<vmem>>, vector<104x1xi32>
    %c0_1 = arith.constant 0 : index
    %c1 = arith.constant 1 : index
    %2 = vector.load %arg1[%c0_1, %c1] : memref<104x2xi32, #tpu.memory_space<vmem>>, vector<104x1xi32>
    %3 = vector.broadcast %1 : vector<104x1xi32> to vector<104x32xi32>
    %4 = arith.cmpi eq, %0, %3 : vector<104x32xi32>
    %c16_i32 = arith.constant 16 : i32
    %5 = vector.broadcast %c16_i32 : i32 to vector<104x1xi32>
    %6 = arith.addi %2, %5 : vector<104x1xi32>
    %7 = vector.broadcast %6 : vector<104x1xi32> to vector<104x32xi32>
    %8 = arith.cmpi eq, %0, %7 : vector<104x32xi32>
    %9 = arith.ori %4, %8 : vector<104x32xi1>
    %10 = arith.extui %9 : vector<104x32xi1> to vector<104x32xi32>
    %11 = arith.sitofp %10 : vector<104x32xi32> to vector<104x32xf32>
    %12 = arith.truncf %11 : vector<104x32xf32> to vector<104x32xbf16>
    %c0_2 = arith.constant 0 : index
    %c0_3 = arith.constant 0 : index
    %13 = vector.load %arg3[%c0_2, %c0_3] : memref<32x128xbf16, #tpu.memory_space<vmem>>, vector<32x128xbf16>
    %cst = arith.constant dense<0.000000e+00> : vector<104x128xf32>
    %14 = tpu.matmul %12, %13, %cst {dimension_numbers = #tpu.dot_dimension_numbers<[1], [0], [0], [1], [0, 0, 1, 1], [], []>} : vector<104x32xbf16>, vector<32x128xbf16>, vector<104x128xf32> -> vector<104x128xf32>
    %c0_4 = arith.constant 0 : index
    %c0_5 = arith.constant 0 : index
    %15 = vector.load %arg2[%c0_4, %c0_5] : memref<104x8xbf16, #tpu.memory_space<vmem>>, vector<104x8xbf16>
    %c0_6 = arith.constant 0 : index
    %c0_7 = arith.constant 0 : index
    %16 = vector.load %arg4[%c0_6, %c0_7] : memref<8x128xbf16, #tpu.memory_space<vmem>>, vector<8x128xbf16>
    %cst_8 = arith.constant dense<0.000000e+00> : vector<104x128xf32>
    %17 = tpu.matmul %15, %16, %cst_8 {dimension_numbers = #tpu.dot_dimension_numbers<[1], [0], [0], [1], [0, 0, 1, 1], [], []>} : vector<104x8xbf16>, vector<8x128xbf16>, vector<104x128xf32> -> vector<104x128xf32>
    %18 = arith.addf %14, %17 : vector<104x128xf32>
    %c0_9 = arith.constant 0 : index
    %c0_10 = arith.constant 0 : index
    %19 = vector.load %arg5[%c0_9, %c0_10] : memref<1x128xf32, #tpu.memory_space<vmem>>, vector<1x128xf32>
    %20 = vector.broadcast %19 : vector<1x128xf32> to vector<104x128xf32>
    %21 = arith.addf %18, %20 : vector<104x128xf32>
    %c0_11 = arith.constant 0 : index
    %c0_12 = arith.constant 0 : index
    %22 = vector.load %arg6[%c0_11, %c0_12] : memref<104x128xf32, #tpu.memory_space<vmem>>, vector<104x128xf32>
    tpu.vector_store %arg6[%c0_11, %c0_12], %21 {strides = array<i32>} : memref<104x128xf32, #tpu.memory_space<vmem>>, vector<104x128xf32>,
    return
  }
  func.func @transform_0(%arg0: i32) -> (i32, i32) {
    %c0_i32 = arith.constant 0 : i32
    %c0_i32_0 = arith.constant 0 : i32
    return %arg0, %c0_i32 : i32, i32
  }
  func.func @transform_1(%arg0: i32) -> (i32, i32) {
    %c0_i32 = arith.constant 0 : i32
    %c0_i32_0 = arith.constant 0 : i32
    return %arg0, %c0_i32 : i32, i32
  }
  func.func @transform_2(%arg0: i32) -> (i32, i32) {
    %c0_i32 = arith.constant 0 : i32
    %c0_i32_0 = arith.constant 0 : i32
    %c0_i32_1 = arith.constant 0 : i32
    return %c0_i32, %c0_i32_0 : i32, i32
  }
  func.func @transform_3(%arg0: i32) -> (i32, i32) {
    %c0_i32 = arith.constant 0 : i32
    %c0_i32_0 = arith.constant 0 : i32
    %c0_i32_1 = arith.constant 0 : i32
    return %c0_i32, %c0_i32_0 : i32, i32
  }
  func.func @transform_4(%arg0: i32) -> (i32, i32) {
    %c0_i32 = arith.constant 0 : i32
    %c0_i32_0 = arith.constant 0 : i32
    %c0_i32_1 = arith.constant 0 : i32
    return %c0_i32, %c0_i32_0 : i32, i32
  }
  func.func @transform_5(%arg0: i32) -> (i32, i32) {
    %c0_i32 = arith.constant 0 : i32
    %c0_i32_0 = arith.constant 0 : i32
    return %arg0, %c0_i32 : i32, i32
  }
}

</mosaic_0001>

<llo_original>
// kernel: tpu_custom_call.1
$region0: #{tpu_custom_call.1}
  #allocation0 [shape = 'u32[]', space=smem, size = 0x4, offset = 0x4, fixed_abs, tag = 'smem constant byte address 0x4 - core index']
  #allocation1 [shape = 'u32[144,128]{1,0:T(1,128)}', space=vmem, size = 0x12000, scoped, tag = 'internal scratch']
  %s0 = inlined_call_operand.vmem [shape: s32[200,2], index: 0, kind: input, shape index: {}]
  %s1 = inlined_call_operand.vmem [shape: bf16[200,8], index: 1, kind: input, shape index: {}]
  %s2 = inlined_call_operand.vmem [shape: bf16[32,128], index: 2, kind: input, shape index: {}]
  %s3 = inlined_call_operand.vmem [shape: bf16[8,128], index: 3, kind: input, shape index: {}]
  %s4 = inlined_call_operand.vmem [shape: f32[1,128], index: 4, kind: input, shape index: {}]
  %s5 = inlined_call_operand.hbm [shape: f32[200,128], index: 5, kind: output, shape index: {}]
  %s6 = sld [smem:[#allocation0]]
  $region53: #{tpu_custom_call.1} parent=0
    _
  %s8 = ssub.s32 1, %s6
  %s9 = scalar_select 0, %s8, %s6
  $region1: #{tpu_custom_call.1} parent=0
    #allocation2 [shape = 'u8[106496]{0}', space=vmem, size = 0x1a000, scoped, tag = 'output window, operand 0']
    #allocation3 [shape = 's32[2]{0}', space=sflag, size = 0x8, scoped, tag = 'scoped memory for tpu_custom_call.1']
    %10 = vsyncpa [#allocation3], 0
    %s11 = scalar_lea.sflag [#allocation3], 1
    %12 = vsyncpa %s11, 0
    loop: start=0, step=1, limit=4
    $region2: #{tpu_custom_call.1} parent=1 // loop_pre_header
      _
    $region3: #{tpu_custom_call.1} parent=1 // loop_header
      %s14 = sphi 0, %s18
      %p15 = scmp.ge.s32.totalorder %s14, 4
      %s24 = sphi 0, %s26
      %s27 = sphi 0, %s24
      %s28 = sphi 0, %s27
      %s44 = sphi 0, %s28
      %s50 = sphi 0, %s52
      %s53 = sphi 0, %s50
      %s54 = sphi 0, %s53
      %s70 = sphi 0, %s54
      %s74 = sphi 0, %s74
      %s76 = sphi 0, %s74
      %s77 = sphi 0, %s76
      %s91 = sphi 0, %s77
      %s95 = sphi 0, %s95
      %s97 = sphi 0, %s95
      %s98 = sphi 0, %s97
      %s112 = sphi 0, %s98
      %s116 = sphi 0, %s116
      %s118 = sphi 0, %s116
      %s119 = sphi 0, %s118
      %s133 = sphi 0, %s119
      %s139 = sphi 0, %s141
      %s142 = sphi 0, %s139
      %s143 = sphi 0, %s142
      %s159 = sphi 0, %s143
    $region4: #{tpu_custom_call.1} parent=1 // loop_header_branch
      %17 = sbr.rel (%p15) target = $region8
    $region5: #{tpu_custom_call.1} parent=1 // loop_body
      %s19 = ssub.s32 %s14, 1
      %s20 = ssub.s32 %s14, 2
      %s21 = sadd.s32 %s14, 1
      %s22 = ssub.s32 %s14, %s21
      %p23 = scmp.eq.s32.totalorder %s22, 0
      %s25 = sadd.s32 %s24, 1
      %s26 = scalar_select %p23, %s24, %s25
      %p29 = pneg %p23
      %p30 = scmp.eq.s32.totalorder %s14, 1
      %p31 = por %p29, %p30
      %p32 = scmp.ne.s32.totalorder %s24, %s27
      %p33 = scmp.eq.s32.totalorder %s14, 0
      %p34 = por %p32, %p33
      %p35 = scmp.ne.s32.totalorder %s24, %s27
      %p36 = scmp.eq.s32.totalorder %s19, 1
      %p37 = por %p35, %p36
      %p38 = scmp.ne.s32.totalorder %s27, %s28
      %p39 = scmp.eq.s32.totalorder %s19, 0
      %p40 = por %p38, %p39
      %p41 = scmp.ne.s32.totalorder %s27, %s28
      %p42 = scmp.eq.s32.totalorder %s20, 1
      %p43 = por %p41, %p42
      %p45 = scmp.ne.s32.totalorder %s28, %s44
      %p46 = scmp.eq.s32.totalorder %s20, 0
      %p47 = por %p45, %p46
      %s48 = ssub.s32 %s14, %s21
      %p49 = scmp.eq.s32.totalorder %s48, 0
      %s51 = sadd.s32 %s50, 1
      %s52 = scalar_select %p49, %s50, %s51
      %p55 = pneg %p49
      %p56 = scmp.eq.s32.totalorder %s14, 1
      %p57 = por %p55, %p56
      %p58 = scmp.ne.s32.totalorder %s50, %s53
      %p59 = scmp.eq.s32.totalorder %s14, 0
      %p60 = por %p58, %p59
      %p61 = scmp.ne.s32.totalorder %s50, %s53
      %p62 = scmp.eq.s32.totalorder %s19, 1
      %p63 = por %p61, %p62
      %p64 = scmp.ne.s32.totalorder %s53, %s54
      %p65 = scmp.eq.s32.totalorder %s19, 0
      %p66 = por %p64, %p65
      %p67 = scmp.ne.s32.totalorder %s53, %s54
      %p68 = scmp.eq.s32.totalorder %s20, 1
      %p69 = por %p67, %p68
      %p71 = scmp.ne.s32.totalorder %s54, %s70
      %p72 = scmp.eq.s32.totalorder %s20, 0
      %p73 = por %p71, %p72
      %s75 = sadd.s32 %s74, 1
      %p78 = scmp.eq.s32.totalorder %s14, 1
      %p79 = scmp.ne.s32.totalorder %s74, %s76
      %p80 = scmp.eq.s32.totalorder %s14, 0
      %p81 = por %p79, %p80
      %p82 = scmp.ne.s32.totalorder %s74, %s76
      %p83 = scmp.eq.s32.totalorder %s19, 1
      %p84 = por %p82, %p83
      %p85 = scmp.ne.s32.totalorder %s76, %s77
      %p86 = scmp.eq.s32.totalorder %s19, 0
      %p87 = por %p85, %p86
      %p88 = scmp.ne.s32.totalorder %s76, %s77
      %p89 = scmp.eq.s32.totalorder %s20, 1
      %p90 = por %p88, %p89
      %p92 = scmp.ne.s32.totalorder %s77, %s91
      %p93 = scmp.eq.s32.totalorder %s20, 0
      %p94 = por %p92, %p93
      %s96 = sadd.s32 %s95, 1
      %p99 = scmp.eq.s32.totalorder %s14, 1
      %p100 = scmp.ne.s32.totalorder %s95, %s97
      %p101 = scmp.eq.s32.totalorder %s14, 0
      %p102 = por %p100, %p101
      %p103 = scmp.ne.s32.totalorder %s95, %s97
      %p104 = scmp.eq.s32.totalorder %s19, 1
      %p105 = por %p103, %p104
      %p106 = scmp.ne.s32.totalorder %s97, %s98
      %p107 = scmp.eq.s32.totalorder %s19, 0
      %p108 = por %p106, %p107
      %p109 = scmp.ne.s32.totalorder %s97, %s98
      %p110 = scmp.eq.s32.totalorder %s20, 1
      %p111 = por %p109, %p110
      %p113 = scmp.ne.s32.totalorder %s98, %s112
      %p114 = scmp.eq.s32.totalorder %s20, 0
      %p115 = por %p113, %p114
      %s117 = sadd.s32 %s116, 1
      %p120 = scmp.eq.s32.totalorder %s14, 1
      %p121 = scmp.ne.s32.totalorder %s116, %s118
      %p122 = scmp.eq.s32.totalorder %s14, 0
      %p123 = por %p121, %p122
      %p124 = scmp.ne.s32.totalorder %s116, %s118
      %p125 = scmp.eq.s32.totalorder %s19, 1
      %p126 = por %p124, %p125
      %p127 = scmp.ne.s32.totalorder %s118, %s119
      %p128 = scmp.eq.s32.totalorder %s19, 0
      %p129 = por %p127, %p128
      %p130 = scmp.ne.s32.totalorder %s118, %s119
      %p131 = scmp.eq.s32.totalorder %s20, 1
      %p132 = por %p130, %p131
      %p134 = scmp.ne.s32.totalorder %s119, %s133
      %p135 = scmp.eq.s32.totalorder %s20, 0
      %p136 = por %p134, %p135
      %s137 = ssub.s32 %s14, %s21
      %p138 = scmp.eq.s32.totalorder %s137, 0
      %s140 = sadd.s32 %s139, 1
      %s141 = scalar_select %p138, %s139, %s140
      %p144 = pneg %p138
      %p145 = scmp.eq.s32.totalorder %s14, 1
      %p146 = por %p144, %p145
      %p147 = scmp.ne.s32.totalorder %s139, %s142
      %p148 = scmp.eq.s32.totalorder %s14, 0
      %p149 = por %p147, %p148
      %p150 = scmp.ne.s32.totalorder %s139, %s142
      %p151 = scmp.eq.s32.totalorder %s19, 1
      %p152 = por %p150, %p151
      %p153 = scmp.ne.s32.totalorder %s142, %s143
      %p154 = scmp.eq.s32.totalorder %s19, 0
      %p155 = por %p153, %p154
      %p156 = scmp.ne.s32.totalorder %s142, %s143
      %p157 = scmp.eq.s32.totalorder %s20, 1
      %p158 = por %p156, %p157
      %p160 = scmp.ne.s32.totalorder %s143, %s159
      %p161 = scmp.eq.s32.totalorder %s20, 0
      %p162 = por %p160, %p161
      %p163 = scmp.le.s32.totalorder 1, %s14
      %p164 = scmp.lt.s32.totalorder %s14, 3
      %p165 = pnand %p163, %p164
      %p166 = pneg %p165
      // Predicated region
      $region9: #{tpu_custom_call.1} parent=5 // pred_check
        _
      $region10: #{tpu_custom_call.1} parent=5 // pred_check_branch
        %168 = sbr.rel (%p165) target = $region12
      $region11: #{tpu_custom_call.1} parent=5 // pred_region
        %s169 = ssub.s32 %s14, 1
        // Predicated region
        $region13: #{tpu_custom_call.1} parent=11 // pred_check
          %p170 = pneg %p87
        $region14: #{tpu_custom_call.1} parent=11 // pred_check_branch
          %172 = sbr.rel (%p170) target = $region16
        $region15: #{tpu_custom_call.1} parent=11 // pred_region
          _
        $region16: #{tpu_custom_call.1} parent=11 // pred_fallthru
          _
        // Predicated region
        $region17: #{tpu_custom_call.1} parent=11 // pred_check
          %p173 = pneg %p108
        $region18: #{tpu_custom_call.1} parent=11 // pred_check_branch
          %175 = sbr.rel (%p173) target = $region20
        $region19: #{tpu_custom_call.1} parent=11 // pred_region
          _
        $region20: #{tpu_custom_call.1} parent=11 // pred_fallthru
          _
        // Predicated region
        $region21: #{tpu_custom_call.1} parent=11 // pred_check
          %p176 = pneg %p129
        $region22: #{tpu_custom_call.1} parent=11 // pred_check_branch
          %178 = sbr.rel (%p176) target = $region24
        $region23: #{tpu_custom_call.1} parent=11 // pred_region
          _
        $region24: #{tpu_custom_call.1} parent=11 // pred_fallthru
          _
      $region12: #{tpu_custom_call.1} parent=5 // pred_fallthru
        _
      %p179 = scmp.lt.s32.totalorder %s14, 2
      // Predicated region
      $region25: #{tpu_custom_call.1} parent=5 // pred_check
        %p180 = pneg %p179
      $region26: #{tpu_custom_call.1} parent=5 // pred_check_branch
        %182 = sbr.rel (%p180) target = $region28
      $region27: #{tpu_custom_call.1} parent=5 // pred_region
        // Predicated region
        $region29: #{tpu_custom_call.1} parent=27 // pred_check
          %p183 = pneg %p34
        $region30: #{tpu_custom_call.1} parent=27 // pred_check_branch
          %185 = sbr.rel (%p183) target = $region32
        $region31: #{tpu_custom_call.1} parent=27 // pred_region
          %s186 = smul.u32 13, %s14
          %s187 = ssub.s32 25, %s186
          %p188 = scmp.lt.s32.totalorder %s187, 13
          %s189 = scalar_select %p188, %s187, 13
          %s190 = smul.u32 128, %s189
          %p191 = scmp.lt.s32.totalorder %s186, 24
          %s192 = scalar_select %p191, %s186, 24
          %s193 = smul.addr %s192, 8
          %s194 = scalar_lea.vmem %s0, %s193
          %s195 = smul.u32 13, %s14
          %s196 = ssub.s32 25, %s195
          %p197 = scmp.lt.s32.totalorder %s196, 13
          %s198 = scalar_select %p197, %s196, 13
          %s199 = smul.u32 128, %s198
        $region32: #{tpu_custom_call.1} parent=27 // pred_fallthru
          _
        // Predicated region
        $region33: #{tpu_custom_call.1} parent=27 // pred_check
          %p200 = pneg %p60
        $region34: #{tpu_custom_call.1} parent=27 // pred_check_branch
          %202 = sbr.rel (%p200) target = $region36
        $region35: #{tpu_custom_call.1} parent=27 // pred_region
          %s203 = smul.u32 13, %s14
          %s204 = ssub.s32 25, %s203
          %p205 = scmp.lt.s32.totalorder %s204, 13
          %s206 = scalar_select %p205, %s204, 13
          %s207 = smul.u32 64, %s206
          %p208 = scmp.lt.s32.totalorder %s203, 24
          %s209 = scalar_select %p208, %s203, 24
          %s210 = smul.addr %s209, 4
          %s211 = scalar_lea.vmem %s1, %s210
          %s212 = smul.u32 13, %s14
          %s213 = ssub.s32 25, %s212
          %p214 = scmp.lt.s32.totalorder %s213, 13
          %s215 = scalar_select %p214, %s213, 13
          %s216 = smul.u32 64, %s215
        $region36: #{tpu_custom_call.1} parent=27 // pred_fallthru
          _
      $region28: #{tpu_custom_call.1} parent=5 // pred_fallthru
        _
      %p217 = scmp.le.s32.totalorder 1, %s14
      %p218 = scmp.lt.s32.totalorder %s14, 3
      %p219 = pnand %p217, %p218
      %p220 = pneg %p219
      // Predicated region
      $region37: #{tpu_custom_call.1} parent=5 // pred_check
        _
      $region38: #{tpu_custom_call.1} parent=5 // pred_check_branch
        %222 = sbr.rel (%p219) target = $region40
      $region39: #{tpu_custom_call.1} parent=5 // pred_region
        %s223 = ssub.s32 %s14, 1
        %s224 = smul.u32 13, %s19
        %s225 = ssub.s32 25, %s224
        %p226 = scmp.lt.s32.totalorder %s225, 13
        %s227 = scalar_select %p226, %s225, 13
        %s228 = smul.u32 128, %s227
        %p229 = scmp.lt.s32.totalorder %s224, 24
        %s230 = scalar_select %p229, %s224, 24
        %s231 = smul.addr %s230, 8
        %s232 = scalar_lea.vmem %s0, %s231
        %p233 = pneg %p40
        %p234 = pneg %p37
        %s235 = smul.u32 13, %s19
        %s236 = ssub.s32 25, %s235
        %p237 = scmp.lt.s32.totalorder %s236, 13
        %s238 = scalar_select %p237, %s236, 13
        %s239 = smul.u32 64, %s238
        %p240 = scmp.lt.s32.totalorder %s235, 24
        %s241 = scalar_select %p240, %s235, 24
        %s242 = smul.addr %s241, 4
        %s243 = scalar_lea.vmem %s1, %s242
        %p244 = pneg %p66
        %p245 = pneg %p63
        %p246 = pneg %p87
        %p247 = pneg %p84
        %p248 = pneg %p108
        %p249 = pneg %p105
        %p250 = pneg %p129
        %p251 = pneg %p126
        %p252 = pneg %p155
        %p253 = pneg %p152
        %s254 = sand.u32 %s142, 1
        %s255 = scalar_lea.sflag [#allocation3], %s254
        %s256 = sand.u32 %s142, 1
        %s257 = smul.addr %s256, 104
        %s258 = scalar_lea.vmem [#allocation2], %s257
        %s259 = smul.u32 13, %s19
        %s260 = ssub.s32 25, %s259
        %p261 = scmp.lt.s32.totalorder %s260, 13
        %s262 = scalar_select %p261, %s260, 13
        %s263 = smul.u32 128, %s262
        %p264 = scmp.lt.s32.totalorder %s259, 24
        %s265 = scalar_select %p264, %s259, 24
        %s266 = smul.addr %s265, 8
        %s267 = scalar_lea.vmem %s0, %s266
        %s268 = smul.u32 13, %s19
        %s269 = ssub.s32 25, %s268
        %p270 = scmp.lt.s32.totalorder %s269, 13
        %s271 = scalar_select %p270, %s269, 13
        %s272 = smul.u32 128, %s271
        %s273 = smul.u32 13, %s19
        %s274 = ssub.s32 25, %s273
        %p275 = scmp.lt.s32.totalorder %s274, 13
        %s276 = scalar_select %p275, %s274, 13
        %s277 = smul.u32 64, %s276
        %p278 = scmp.lt.s32.totalorder %s273, 24
        %s279 = scalar_select %p278, %s273, 24
        %s280 = smul.addr %s279, 4
        %s281 = scalar_lea.vmem %s1, %s280
        %s282 = smul.u32 13, %s19
        %s283 = ssub.s32 25, %s282
        %p284 = scmp.lt.s32.totalorder %s283, 13
        %s285 = scalar_select %p284, %s283, 13
        %s286 = smul.u32 64, %s285
        %s287 = smul.u32 13, %s19
        %s288 = ssub.s32 25, %s287
        %p289 = scmp.lt.s32.totalorder %s288, 13
        %s290 = scalar_select %p289, %s288, 13
        %s291 = smul.u32 128, %s290
        %v293 = vlaneseq
        %v294 = vand.u32 %v293, 127
        %v295 = vld [vmem:[%s267] sm:$0xff]
        %v296 = vld [vmem:[%s267 + $0x8] sm:$0xff]
        %v297 = vld [vmem:[%s267 + $0x10] sm:$0xff]
        %v298 = vld [vmem:[%s267 + $0x18] sm:$0xff]
        %v299 = vld [vmem:[%s267 + $0x20] sm:$0xff]
        %v300 = vld [vmem:[%s267 + $0x28] sm:$0xff]
        %v301 = vld [vmem:[%s267 + $0x30] sm:$0xff]
        %v302 = vld [vmem:[%s267 + $0x38] sm:$0xff]
        %v303 = vld [vmem:[%s267 + $0x40] sm:$0xff]
        %v304 = vld [vmem:[%s267 + $0x48] sm:$0xff]
        %v305 = vld [vmem:[%s267 + $0x50] sm:$0xff]
        %v306 = vld [vmem:[%s267 + $0x58] sm:$0xff]
        %v307 = vld [vmem:[%s267 + $0x60] sm:$0xff]
        %308 = vset.pattern.permute.xlu0 0
        %309 = vperm.xlu0 %308, %v295
        %v310 = vpop.permute.xlu0 %309
        %311 = vset.pattern.permute.xlu0 0
        %312 = vperm.xlu0 %311, %v296
        %v313 = vpop.permute.xlu0 %312
        %314 = vset.pattern.permute.xlu0 0
        %315 = vperm.xlu0 %314, %v297
        %v316 = vpop.permute.xlu0 %315
        %317 = vset.pattern.permute.xlu0 0
        %318 = vperm.xlu0 %317, %v298
        %v319 = vpop.permute.xlu0 %318
        %320 = vset.pattern.permute.xlu0 0
        %321 = vperm.xlu0 %320, %v299
        %v322 = vpop.permute.xlu0 %321
        %323 = vset.pattern.permute.xlu0 0
        %324 = vperm.xlu0 %323, %v300
        %v325 = vpop.permute.xlu0 %324
        %326 = vset.pattern.permute.xlu0 0
        %327 = vperm.xlu0 %326, %v301
        %v328 = vpop.permute.xlu0 %327
        %329 = vset.pattern.permute.xlu0 0
        %330 = vperm.xlu0 %329, %v302
        %v331 = vpop.permute.xlu0 %330
        %332 = vset.pattern.permute.xlu0 0
        %333 = vperm.xlu0 %332, %v303
        %v334 = vpop.permute.xlu0 %333
        %335 = vset.pattern.permute.xlu0 0
        %336 = vperm.xlu0 %335, %v304
        %v337 = vpop.permute.xlu0 %336
        %338 = vset.pattern.permute.xlu0 0
        %339 = vperm.xlu0 %338, %v305
        %v340 = vpop.permute.xlu0 %339
        %341 = vset.pattern.permute.xlu0 0
        %342 = vperm.xlu0 %341, %v306
        %v343 = vpop.permute.xlu0 %342
        %344 = vset.pattern.permute.xlu0 0
        %345 = vperm.xlu0 %344, %v307
        %v346 = vpop.permute.xlu0 %345
        %vm347 = vcmp.eq.s32.totalorder %v294, %v310
        %vm348 = vcmp.eq.s32.totalorder %v294, %v313
        %vm349 = vcmp.eq.s32.totalorder %v294, %v316
        %vm350 = vcmp.eq.s32.totalorder %v294, %v319
        %vm351 = vcmp.eq.s32.totalorder %v294, %v322
        %vm352 = vcmp.eq.s32.totalorder %v294, %v325
        %vm353 = vcmp.eq.s32.totalorder %v294, %v328
        %vm354 = vcmp.eq.s32.totalorder %v294, %v331
        %vm355 = vcmp.eq.s32.totalorder %v294, %v334
        %vm356 = vcmp.eq.s32.totalorder %v294, %v337
        %vm357 = vcmp.eq.s32.totalorder %v294, %v340
        %vm358 = vcmp.eq.s32.totalorder %v294, %v343
        %vm359 = vcmp.eq.s32.totalorder %v294, %v346
        %v360 = vadd.s32 %v295, 16
        %v361 = vadd.s32 %v296, 16
        %v362 = vadd.s32 %v297, 16
        %v363 = vadd.s32 %v298, 16
        %v364 = vadd.s32 %v299, 16
        %v365 = vadd.s32 %v300, 16
        %v366 = vadd.s32 %v301, 16
        %v367 = vadd.s32 %v302, 16
        %v368 = vadd.s32 %v303, 16
        %v369 = vadd.s32 %v304, 16
        %v370 = vadd.s32 %v305, 16
        %v371 = vadd.s32 %v306, 16
        %v372 = vadd.s32 %v307, 16
        %373 = vset.pattern.permute.xlu0 1
        %374 = vperm.xlu0 %373, %v360
        %v375 = vpop.permute.xlu0 %374
        %376 = vset.pattern.permute.xlu0 1
        %377 = vperm.xlu0 %376, %v361
        %v378 = vpop.permute.xlu0 %377
        %379 = vset.pattern.permute.xlu0 1
        %380 = vperm.xlu0 %379, %v362
        %v381 = vpop.permute.xlu0 %380
        %382 = vset.pattern.permute.xlu0 1
        %383 = vperm.xlu0 %382, %v363
        %v384 = vpop.permute.xlu0 %383
        %385 = vset.pattern.permute.xlu0 1
        %386 = vperm.xlu0 %385, %v364
        %v387 = vpop.permute.xlu0 %386
        %388 = vset.pattern.permute.xlu0 1
        %389 = vperm.xlu0 %388, %v365
        %v390 = vpop.permute.xlu0 %389
        %391 = vset.pattern.permute.xlu0 1
        %392 = vperm.xlu0 %391, %v366
        %v393 = vpop.permute.xlu0 %392
        %394 = vset.pattern.permute.xlu0 1
        %395 = vperm.xlu0 %394, %v367
        %v396 = vpop.permute.xlu0 %395
        %397 = vset.pattern.permute.xlu0 1
        %398 = vperm.xlu0 %397, %v368
        %v399 = vpop.permute.xlu0 %398
        %400 = vset.pattern.permute.xlu0 1
        %401 = vperm.xlu0 %400, %v369
        %v402 = vpop.permute.xlu0 %401
        %403 = vset.pattern.permute.xlu0 1
        %404 = vperm.xlu0 %403, %v370
        %v405 = vpop.permute.xlu0 %404
        %406 = vset.pattern.permute.xlu0 1
        %407 = vperm.xlu0 %406, %v371
        %v408 = vpop.permute.xlu0 %407
        %409 = vset.pattern.permute.xlu0 1
        %410 = vperm.xlu0 %409, %v372
        %v411 = vpop.permute.xlu0 %410
        %vm412 = vcmp.eq.s32.totalorder %v294, %v375
        %vm413 = vcmp.eq.s32.totalorder %v294, %v378
        %vm414 = vcmp.eq.s32.totalorder %v294, %v381
        %vm415 = vcmp.eq.s32.totalorder %v294, %v384
        %vm416 = vcmp.eq.s32.totalorder %v294, %v387
        %vm417 = vcmp.eq.s32.totalorder %v294, %v390
        %vm418 = vcmp.eq.s32.totalorder %v294, %v393
        %vm419 = vcmp.eq.s32.totalorder %v294, %v396
        %vm420 = vcmp.eq.s32.totalorder %v294, %v399
        %vm421 = vcmp.eq.s32.totalorder %v294, %v402
        %vm422 = vcmp.eq.s32.totalorder %v294, %v405
        %vm423 = vcmp.eq.s32.totalorder %v294, %v408
        %vm424 = vcmp.eq.s32.totalorder %v294, %v411
        %vm425 = vmor %vm347, %vm412
        %vm426 = vmor %vm348, %vm413
        %vm427 = vmor %vm349, %vm414
        %vm428 = vmor %vm350, %vm415
        %vm429 = vmor %vm351, %vm416
        %vm430 = vmor %vm352, %vm417
        %vm431 = vmor %vm353, %vm418
        %vm432 = vmor %vm354, %vm419
        %vm433 = vmor %vm355, %vm420
        %vm434 = vmor %vm356, %vm421
        %vm435 = vmor %vm357, %vm422
        %vm436 = vmor %vm358, %vm423
        %vm437 = vmor %vm359, %vm424
        %v438 = vsel %vm425, 1, 0
        %v439 = vsel %vm426, 1, 0
        %v440 = vsel %vm427, 1, 0
        %v441 = vsel %vm428, 1, 0
        %v442 = vsel %vm429, 1, 0
        %v443 = vsel %vm430, 1, 0
        %v444 = vsel %vm431, 1, 0
        %v445 = vsel %vm432, 1, 0
        %v446 = vsel %vm433, 1, 0
        %v447 = vsel %vm434, 1, 0
        %v448 = vsel %vm435, 1, 0
        %v449 = vsel %vm436, 1, 0
        %v450 = vsel %vm437, 1, 0
        %v451 = vcvt.s32.f32 %v438
        %v452 = vcvt.s32.f32 %v439
        %v453 = vcvt.s32.f32 %v440
        %v454 = vcvt.s32.f32 %v441
        %v455 = vcvt.s32.f32 %v442
        %v456 = vcvt.s32.f32 %v443
        %v457 = vcvt.s32.f32 %v444
        %v458 = vcvt.s32.f32 %v445
        %v459 = vcvt.s32.f32 %v446
        %v460 = vcvt.s32.f32 %v447
        %v461 = vcvt.s32.f32 %v448
        %v462 = vcvt.s32.f32 %v449
        %v463 = vcvt.s32.f32 %v450
        %v464 = vpack.c.bf16 %v452, %v451
        %v465 = vpack.c.bf16 %v454, %v453
        %v466 = vpack.c.bf16 %v456, %v455
        %v467 = vpack.c.bf16 %v458, %v457
        %v468 = vpack.c.bf16 %v460, %v459
        %v469 = vpack.c.bf16 %v462, %v461
        %v470 = vpack.c.bf16 %v463, %v463
        %v471 = vld [vmem:[%s2] sm:$0xf]
        %v472 = vld [vmem:[%s2 + $0x4] sm:$0xf]
        %v473 = vld [vmem:[%s2 + $0x8] sm:$0xf]
        %v474 = vld [vmem:[%s2 + $0xc] sm:$0xf]
        %v475 = vld [vmem:[%s281] sm:$0xf]
        %v476 = vld [vmem:[%s281 + $0x4] sm:$0xf]
        %v477 = vld [vmem:[%s281 + $0x8] sm:$0xf]
        %v478 = vld [vmem:[%s281 + $0xc] sm:$0xf]
        %v479 = vld [vmem:[%s281 + $0x10] sm:$0xf]
        %v480 = vld [vmem:[%s281 + $0x14] sm:$0xf]
        %v481 = vld [vmem:[%s281 + $0x18] sm:$0xf]
        %v482 = vld [vmem:[%s281 + $0x1c] sm:$0xf]
        %v483 = vld [vmem:[%s281 + $0x20] sm:$0xf]
        %v484 = vld [vmem:[%s281 + $0x24] sm:$0xf]
        %v485 = vld [vmem:[%s281 + $0x28] sm:$0xf]
        %v486 = vld [vmem:[%s281 + $0x2c] sm:$0xf]
        %v487 = vld [vmem:[%s281 + $0x30] sm:$0xf]
        %v488 = vld [vmem:[%s3] sm:$0xf]
        %v502 = vunpack.c.l.b16 %v475
        %v503 = vunpack.c.l.b16 %v476
        %v504 = vunpack.c.l.b16 %v477
        %v505 = vunpack.c.l.b16 %v478
        %v506 = vunpack.c.l.b16 %v479
        %v507 = vunpack.c.l.b16 %v480
        %v508 = vunpack.c.l.b16 %v481
        %v509 = vunpack.c.l.b16 %v482
        %v510 = vunpack.c.l.b16 %v483
        %v511 = vunpack.c.l.b16 %v484
        %v512 = vunpack.c.l.b16 %v485
        %v513 = vunpack.c.l.b16 %v486
        %v514 = vunpack.c.l.b16 %v487
        %v515 = vpack.c.b16 %v503, %v502
        %v516 = vpack.c.b16 %v505, %v504
        %v517 = vpack.c.b16 %v507, %v506
        %v518 = vpack.c.b16 %v509, %v508
        %v519 = vpack.c.b16 %v511, %v510
        %v520 = vpack.c.b16 %v513, %v512
        %v521 = vpack.c.b16 %v514, %v514
        %vm522 = vcmask 64512
        %v524 = vsel %vm522, %v515, 0
        %v527 = vsel %vm522, %v516, 0
        %v530 = vsel %vm522, %v517, 0
        %v533 = vsel %vm522, %v518, 0
        %v536 = vsel %vm522, %v519, 0
        %v539 = vsel %vm522, %v520, 0
        %v542 = vsel %vm522, %v521, 0
        %vm544 = vcmask 1043456
        %v546 = vsel %vm544, %v488, 0
        %548 = vmatprep.subr.bf16.mxu0 0
        %549 = vmatpush1.bf16.msra.mxu0 0
        %550 = vmatprep.subr.bf16.mxu0 0
        %551 = vmatpush1.bf16.msra.mxu0 0
        %552 = vmatprep.subr.bf16.mxu0 0
        %553 = vmatpush1.bf16.msra.mxu0 0
        %554 = vmatprep.subr.bf16.mxu0 0
        %555 = vmatpush1.bf16.msra.mxu0 0
        %556 = vmatprep.subr.bf16.mxu0 0
        %557 = vmatpush1.bf16.msra.mxu0 0
        %558 = vmatprep.subr.bf16.mxu0 0
        %559 = vmatpush1.bf16.msra.mxu0 0
        %560 = vmatprep.subr.bf16.mxu0 0
        %561 = vmatpush1.bf16.msra.mxu0 0
        %562 = vmatprep.subr.bf16.mxu0 0
        %563 = vmatpush1.bf16.msra.mxu0 %v546
        %564 = vmatprep.subr.bf16.mxu0 0
        %565 = vmatpush2.bf16.msra.mxu0 0
        %566 = vmatprep.subr.bf16.mxu0 0
        %567 = vmatpush2.bf16.msra.mxu0 0
        %568 = vmatprep.subr.bf16.mxu0 0
        %569 = vmatpush2.bf16.msra.mxu0 0
        %570 = vmatprep.subr.bf16.mxu0 0
        %571 = vmatpush2.bf16.msra.mxu0 0
        %572 = vmatprep.subr.bf16.mxu0 0
        %573 = vmatpush2.bf16.msra.mxu0 0
        %574 = vmatprep.subr.bf16.mxu0 0
        %575 = vmatpush2.bf16.msra.mxu0 0
        %576 = vmatprep.subr.bf16.mxu0 0
        %577 = vmatpush2.bf16.msra.mxu0 0
        %578 = vmatprep.subr.bf16.mxu0 0
        %579 = vmatpush2.bf16.msra.mxu0 0
        %580 = vmatprep.mubr.bf16.mxu0 0
        %581 = vmatmul.mubr.bf16.gmra.mxu0 %v524
        %v582 = vpop.f32.mrf.mxu0
        %v583 = vadd.f32 0.0, %v582
        %v584 = vpop.f32.mrf.mxu0
        %v585 = vpop.f32.mrf.mxu0
        %v586 = vadd.f32 0.0, %v585
        %v587 = vpop.f32.mrf.mxu0
        %588 = vmatprep.mubr.bf16.mxu0 0
        %589 = vmatmul.mubr.bf16.gmra.mxu0 %v527
        %v590 = vpop.f32.mrf.mxu0
        %v591 = vadd.f32 0.0, %v590
        %v592 = vpop.f32.mrf.mxu0
        %v593 = vpop.f32.mrf.mxu0
        %v594 = vadd.f32 0.0, %v593
        %v595 = vpop.f32.mrf.mxu0
        %596 = vmatprep.mubr.bf16.mxu0 0
        %597 = vmatmul.mubr.bf16.gmra.mxu0 %v530
        %v598 = vpop.f32.mrf.mxu0
        %v599 = vadd.f32 0.0, %v598
        %v600 = vpop.f32.mrf.mxu0
        %v601 = vpop.f32.mrf.mxu0
        %v602 = vadd.f32 0.0, %v601
        %v603 = vpop.f32.mrf.mxu0
        %604 = vmatprep.mubr.bf16.mxu0 0
        %605 = vmatmul.mubr.bf16.gmra.mxu0 %v533
        %v606 = vpop.f32.mrf.mxu0
        %v607 = vadd.f32 0.0, %v606
        %v608 = vpop.f32.mrf.mxu0
        %v609 = vpop.f32.mrf.mxu0
        %v610 = vadd.f32 0.0, %v609
        %v611 = vpop.f32.mrf.mxu0
        %612 = vmatprep.mubr.bf16.mxu0 0
        %613 = vmatmul.mubr.bf16.gmra.mxu0 %v536
        %v614 = vpop.f32.mrf.mxu0
        %v615 = vadd.f32 0.0, %v614
        %v616 = vpop.f32.mrf.mxu0
        %v617 = vpop.f32.mrf.mxu0
        %v618 = vadd.f32 0.0, %v617
        %v619 = vpop.f32.mrf.mxu0
        %620 = vmatprep.mubr.bf16.mxu0 0
        %621 = vmatmul.mubr.bf16.gmra.mxu0 %v539
        %v622 = vpop.f32.mrf.mxu0
        %v623 = vadd.f32 0.0, %v622
        %v624 = vpop.f32.mrf.mxu0
        %v625 = vpop.f32.mrf.mxu0
        %v626 = vadd.f32 0.0, %v625
        %v627 = vpop.f32.mrf.mxu0
        %628 = vmatprep.mubr.bf16.mxu0 0
        %629 = vmatmul.mubr.bf16.gmra.mxu0 %v542
        %v630 = vpop.f32.mrf.mxu0
        %v631 = vadd.f32 0.0, %v630
        %v632 = vpop.f32.mrf.mxu0
        %v633 = vpop.f32.mrf.mxu0
        %v634 = vpop.f32.mrf.mxu0
        %635 = vdwg.mxu0
        %v640 = vunpack.c.l.b16 %v471
        %v641 = vunpack.c.l.b16 %v472
        %v642 = vunpack.c.l.b16 %v473
        %v643 = vunpack.c.l.b16 %v474
        %v644 = vpack.c.b16 %v641, %v640
        %v645 = vpack.c.b16 %v643, %v642
        %vm648 = vcmask 261120
        %v650 = vsel %vm648, %v464, 0
        %v653 = vsel %vm648, %v465, 0
        %v656 = vsel %vm648, %v466, 0
        %v659 = vsel %vm648, %v467, 0
        %v662 = vsel %vm648, %v468, 0
        %v665 = vsel %vm648, %v469, 0
        %v668 = vsel %vm648, %v470, 0
        %670 = vmatprep.subr.bf16.mxu0 0
        %671 = vmatpush1.bf16.msra.mxu0 0
        %672 = vmatprep.subr.bf16.mxu0 0
        %673 = vmatpush1.bf16.msra.mxu0 0
        %674 = vmatprep.subr.bf16.mxu0 0
        %675 = vmatpush1.bf16.msra.mxu0 0
        %676 = vmatprep.subr.bf16.mxu0 0
        %677 = vmatpush1.bf16.msra.mxu0 0
        %678 = vmatprep.subr.bf16.mxu0 0
        %679 = vmatpush1.bf16.msra.mxu0 0
        %680 = vmatprep.subr.bf16.mxu0 0
        %681 = vmatpush1.bf16.msra.mxu0 0
        %682 = vmatprep.subr.bf16.mxu0 0
        %683 = vmatpush1.bf16.msra.mxu0 %v645
        %684 = vmatprep.subr.bf16.mxu0 0
        %685 = vmatpush1.bf16.msra.mxu0 %v644
        %686 = vmatprep.subr.bf16.mxu0 0
        %687 = vmatpush2.bf16.msra.mxu0 0
        %688 = vmatprep.subr.bf16.mxu0 0
        %689 = vmatpush2.bf16.msra.mxu0 0
        %690 = vmatprep.subr.bf16.mxu0 0
        %691 = vmatpush2.bf16.msra.mxu0 0
        %692 = vmatprep.subr.bf16.mxu0 0
        %693 = vmatpush2.bf16.msra.mxu0 0
        %694 = vmatprep.subr.bf16.mxu0 0
        %695 = vmatpush2.bf16.msra.mxu0 0
        %696 = vmatprep.subr.bf16.mxu0 0
        %697 = vmatpush2.bf16.msra.mxu0 0
        %698 = vmatprep.subr.bf16.mxu0 0
        %699 = vmatpush2.bf16.msra.mxu0 0
        %700 = vmatprep.subr.bf16.mxu0 0
        %701 = vmatpush2.bf16.msra.mxu0 0
        %702 = vmatprep.mubr.bf16.mxu0 0
        %703 = vmatmul.mubr.bf16.gmra.mxu0 %v650
        %v704 = vpop.f32.mrf.mxu0
        %v705 = vadd.f32 %v583, %v704
        %v706 = vpop.f32.mrf.mxu0
        %v707 = vpop.f32.mrf.mxu0
        %v708 = vadd.f32 %v586, %v707
        %v709 = vpop.f32.mrf.mxu0
        %710 = vmatprep.mubr.bf16.mxu0 0
        %711 = vmatmul.mubr.bf16.gmra.mxu0 %v653
        %v712 = vpop.f32.mrf.mxu0
        %v713 = vadd.f32 %v591, %v712
        %v714 = vpop.f32.mrf.mxu0
        %v715 = vpop.f32.mrf.mxu0
        %v716 = vadd.f32 %v594, %v715
        %v717 = vpop.f32.mrf.mxu0
        %718 = vmatprep.mubr.bf16.mxu0 0
        %719 = vmatmul.mubr.bf16.gmra.mxu0 %v656
        %v720 = vpop.f32.mrf.mxu0
        %v721 = vadd.f32 %v599, %v720
        %v722 = vpop.f32.mrf.mxu0
        %v723 = vpop.f32.mrf.mxu0
        %v724 = vadd.f32 %v602, %v723
        %v725 = vpop.f32.mrf.mxu0
        %726 = vmatprep.mubr.bf16.mxu0 0
        %727 = vmatmul.mubr.bf16.gmra.mxu0 %v659
        %v728 = vpop.f32.mrf.mxu0
        %v729 = vadd.f32 %v607, %v728
        %v730 = vpop.f32.mrf.mxu0
        %v731 = vpop.f32.mrf.mxu0
        %v732 = vadd.f32 %v610, %v731
        %v733 = vpop.f32.mrf.mxu0
        %734 = vmatprep.mubr.bf16.mxu0 0
        %735 = vmatmul.mubr.bf16.gmra.mxu0 %v662
        %v736 = vpop.f32.mrf.mxu0
        %v737 = vadd.f32 %v615, %v736
        %v738 = vpop.f32.mrf.mxu0
        %v739 = vpop.f32.mrf.mxu0
        %v740 = vadd.f32 %v618, %v739
        %v741 = vpop.f32.mrf.mxu0
        %742 = vmatprep.mubr.bf16.mxu0 0
        %743 = vmatmul.mubr.bf16.gmra.mxu0 %v665
        %v744 = vpop.f32.mrf.mxu0
        %v745 = vadd.f32 %v623, %v744
        %v746 = vpop.f32.mrf.mxu0
        %v747 = vpop.f32.mrf.mxu0
        %v748 = vadd.f32 %v626, %v747
        %v749 = vpop.f32.mrf.mxu0
        %750 = vmatprep.mubr.bf16.mxu0 0
        %751 = vmatmul.mubr.bf16.gmra.mxu0 %v668
        %v752 = vpop.f32.mrf.mxu0
        %v753 = vadd.f32 %v631, %v752
        %v754 = vpop.f32.mrf.mxu0
        %v755 = vpop.f32.mrf.mxu0
        %v756 = vpop.f32.mrf.mxu0
        %757 = vdwg.mxu0
        %v758 = vld [vmem:[%s4] sm:$0x1]
        %v760 = vlaneseq
        %v761 = vshrl.u32 %v760, 7
        %v762 = vsub.s32 0, %v761
        %v763 = vrot.slane %v758, %v762
        %v765 = vadd.f32 %v705, %v763
        %v766 = vadd.f32 %v708, %v763
        %v767 = vadd.f32 %v713, %v763
        %v768 = vadd.f32 %v716, %v763
        %v769 = vadd.f32 %v721, %v763
        %v770 = vadd.f32 %v724, %v763
        %v771 = vadd.f32 %v729, %v763
        %v772 = vadd.f32 %v732, %v763
        %v773 = vadd.f32 %v737, %v763
        %v774 = vadd.f32 %v740, %v763
        %v775 = vadd.f32 %v745, %v763
        %v776 = vadd.f32 %v748, %v763
        %v777 = vadd.f32 %v753, %v763
        %778 = vst [vmem:[%s258] sm:$0xff] %v765
        %779 = vst [vmem:[%s258 + $0x8] sm:$0xff] %v766
        %780 = vst [vmem:[%s258 + $0x10] sm:$0xff] %v767
        %781 = vst [vmem:[%s258 + $0x18] sm:$0xff] %v768
        %782 = vst [vmem:[%s258 + $0x20] sm:$0xff] %v769
        %783 = vst [vmem:[%s258 + $0x28] sm:$0xff] %v770
        %784 = vst [vmem:[%s258 + $0x30] sm:$0xff] %v771
        %785 = vst [vmem:[%s258 + $0x38] sm:$0xff] %v772
        %786 = vst [vmem:[%s258 + $0x40] sm:$0xff] %v773
        %787 = vst [vmem:[%s258 + $0x48] sm:$0xff] %v774
        %788 = vst [vmem:[%s258 + $0x50] sm:$0xff] %v775
        %789 = vst [vmem:[%s258 + $0x58] sm:$0xff] %v776
        %790 = vst [vmem:[%s258 + $0x60] sm:$0xff] %v777
        %s791 = sand.u32 %s142, 1
        %s792 = scalar_lea.sflag [#allocation3], %s791
        %s793 = sand.u32 %s142, 1
        %s794 = smul.addr %s793, 104
        %s795 = scalar_lea.vmem [#allocation2], %s794
        // Predicated region
        $region41: #{tpu_custom_call.1} parent=39 // pred_check
          %p796 = pneg %p152
        $region42: #{tpu_custom_call.1} parent=39 // pred_check_branch
          %798 = sbr.rel (%p796) target = $region44
        $region43: #{tpu_custom_call.1} parent=39 // pred_region
          %s799 = smul.u32 13, %s19
          %s800 = ssub.s32 25, %s799
          %p801 = scmp.lt.s32.totalorder %s800, 13
          %s802 = scalar_select %p801, %s800, 13
          %s803 = smul.u32 128, %s802
          %s805 = ssub.s32 1664, %s803
          %806 = vsyncadd %s792, %s805
          %p807 = scmp.ne.s32.totalorder 0, %s803
          %s808 = smul.addr %s799, 128
          %s809 = scalar_lea.hbm %s5, %s808
          %s810 = smul.u32 8, %s802
          %s811 = sshll.u32 %s795, 4
          %s812 = int_to_ptr.vmem [resolvable:$true] %s811
          %s813 = sshll.u32 %s810, 4
          %817 = dma.vmem_to_hbm [thread:$0]  (%p807), %s812, %s813, %s809, %s792, 128, 128, 8
        $region44: #{tpu_custom_call.1} parent=39 // pred_fallthru
          _
      $region40: #{tpu_custom_call.1} parent=5 // pred_fallthru
        _
      %p818 = scmp.le.s32.totalorder 2, %s14
      // Predicated region
      $region45: #{tpu_custom_call.1} parent=5 // pred_check
        %p819 = pneg %p818
      $region46: #{tpu_custom_call.1} parent=5 // pred_check_branch
        %821 = sbr.rel (%p819) target = $region48
      $region47: #{tpu_custom_call.1} parent=5 // pred_region
        %s822 = ssub.s32 %s14, 2
        // Predicated region
        $region49: #{tpu_custom_call.1} parent=47 // pred_check
          %p823 = pneg %p158
        $region50: #{tpu_custom_call.1} parent=47 // pred_check_branch
          %825 = sbr.rel (%p823) target = $region52
        $region51: #{tpu_custom_call.1} parent=47 // pred_region
          %s826 = sand.u32 %s143, 1
          %s827 = scalar_lea.sflag [#allocation3], %s826
          %s828 = sand.u32 %s143, 1
          %s829 = smul.addr %s828, 104
          %s830 = scalar_lea.vmem [#allocation2], %s829
          %831 = dma.done %s827, 1664
        $region52: #{tpu_custom_call.1} parent=47 // pred_fallthru
          _
      $region48: #{tpu_custom_call.1} parent=5 // pred_fallthru
        _
    $region6: #{tpu_custom_call.1} parent=1 // loop_footer
      %s18 = sadd.s32 1, %s14
    $region7: #{tpu_custom_call.1} parent=1 // loop_footer_branch
      %13 = sbr.rel target = $region3
    $region8: #{tpu_custom_call.1} parent=1 // loop_exit
      _
    %832 = vsyncpa [#allocation3], 1
    %s833 = scalar_lea.sflag [#allocation3], 1
    %834 = vsyncpa %s833, 1

</llo_original>
